<compile_context>
chip_gen: v5e
topology: v5e:2x2
jax: 0.10.0
libtpu: 0.0.40
codegen_flags: <defaults>
</compile_context>

<pallas_src>
import math
from functools import partial

import jax
import jax.numpy as jnp
from jax import lax
from jax.experimental import pallas as pl
from jax.experimental.pallas import tpu as pltpu


# ----------------------------- Pallas kernel --------------------------------

def _sin_pos_emb_kernel(t_ref, o_ref, *, half_dim, neg_log_scale):
    """out[b, :half] = sin(t[b]*f[k]), out[b, half:] = cos(t[b]*f[k]).

    f[k] = exp(-k * log(10000)/(half_dim-1)); everything computed in-register
    and written as one lane-dense store.
    """
    t = t_ref[...]                                            # (bb, 1) f32
    bb, dim = o_ref.shape
    # Lane index 0..dim-1; fold to frequency index k = idx mod half_dim.
    idx = lax.broadcasted_iota(jnp.int32, (bb, dim), 1)
    is_sin = idx < half_dim
    k = jnp.where(is_sin, idx, idx - half_dim).astype(jnp.float32)
    freqs = jnp.exp(k * neg_log_scale)                        # EUP exp
    args = t * freqs                                          # VPU broadcast mul
    o_ref[...] = jnp.where(is_sin, jnp.sin(args), jnp.cos(args))


# ------------------------------- wrapper -------------------------------------

def _pick_block_b(B):
    """Largest multiple-of-8 divisor of B (<=1024) giving >=2 grid tiles."""
    best = None
    d = 8
    while d <= min(B // 2, 1024):
        if B % d == 0:
            best = d
        d += 8
    return best if best is not None else B


def sinusoidal_position_embeddings(time, dim, *, block_b=None):
    """time: (B,) float -> (B, dim) float32, matching the PyTorch forward."""
    time = time.astype(jnp.float32)
    B = time.shape[0]
    half_dim = dim // 2
    denom = max(half_dim - 1, 1)
    neg_log_scale = -(math.log(10000.0) / denom)

    if block_b is None:
        block_b = _pick_block_b(B)
    grid = (B // block_b,)

    t2 = time.reshape(B, 1)
    kern = partial(_sin_pos_emb_kernel,
                   half_dim=half_dim, neg_log_scale=neg_log_scale)
    return pl.pallas_call(
        kern,
        grid=grid,
        in_specs=[pl.BlockSpec((block_b, 1), lambda i: (i, 0))],
        out_specs=pl.BlockSpec((block_b, dim), lambda i: (i, 0)),
        out_shape=jax.ShapeDtypeStruct((B, dim), jnp.float32),
        compiler_params=pltpu.CompilerParams(
            dimension_semantics=("parallel",)),
    )(t2)


# --------------------------------- main --------------------------------------

if __name__ == "__main__":
    B, dim = 16, 32
    key = jax.random.PRNGKey(0)
    time = jax.random.uniform(key, (B,), jnp.float32, 0.0, 1000.0)

    fwd = jax.jit(partial(sinusoidal_position_embeddings, dim=dim))
    emb = fwd(time)
    jax.block_until_ready(emb)

    # Pure-JAX reference mirroring the PyTorch forward exactly.
    half = dim // 2
    freqs = jnp.exp(jnp.arange(half, dtype=jnp.float32)
                    * -(math.log(10000.0) / (half - 1)))
    args = time[:, None] * freqs[None, :]
    ref = jnp.concatenate([jnp.sin(args), jnp.cos(args)], axis=-1)

    assert emb.shape == (B, dim), emb.shape
    assert bool(jnp.all(jnp.isfinite(emb)))
    err = float(jnp.max(jnp.abs(emb - ref)))
    assert bool(jnp.allclose(emb, ref, atol=1e-5, rtol=1e-5)), err
    print("KERNEL_OK")
</pallas_src>

<mosaic_0001>
module attributes {stable_mosaic.version = 11 : i64} {
  func.func @_sin_pos_emb_kernel(%arg0: i32, %arg1: memref<8x1xf32, #tpu.memory_space<vmem>>, %arg2: memref<8x32xf32, #tpu.memory_space<vmem>>) attributes {dimension_semantics = [#tpu.dimension_semantics<parallel>], iteration_bounds = array<i64: 2>, scalar_prefetch = 0 : i64, scratch_operands = 0 : i64, tpu.core_type = #tpu.core_type<tc>, window_params = [{transform_indices = @transform_0, window_bounds = array<i64: 8, 1>}, {transform_indices = @transform_1, window_bounds = array<i64: 8, 32>}]} {
    %c0 = arith.constant 0 : index
    %c0_0 = arith.constant 0 : index
    %0 = vector.load %arg1[%c0, %c0_0] : memref<8x1xf32, #tpu.memory_space<vmem>>, vector<8x1xf32>
    %1 = tpu.iota {dimensions = array<i32: 1>} : vector<8x32xi32>
    %c16_i32 = arith.constant 16 : i32
    %2 = vector.broadcast %c16_i32 : i32 to vector<8x32xi32>
    %3 = arith.cmpi slt, %1, %2 : vector<8x32xi32>
    %c16_i32_1 = arith.constant 16 : i32
    %4 = vector.broadcast %c16_i32_1 : i32 to vector<8x32xi32>
    %5 = arith.subi %1, %4 : vector<8x32xi32>
    %6 = arith.select %3, %1, %5 : vector<8x32xi1>, vector<8x32xi32>
    %7 = arith.sitofp %6 : vector<8x32xi32> to vector<8x32xf32>
    %cst = arith.constant -0.614022672 : f32
    %8 = vector.broadcast %cst : f32 to vector<8x32xf32>
    %9 = arith.mulf %7, %8 : vector<8x32xf32>
    %10 = math.exp %9 : vector<8x32xf32>
    %11 = vector.broadcast %0 : vector<8x1xf32> to vector<8x32xf32>
    %12 = arith.mulf %11, %10 : vector<8x32xf32>
    %13 = math.sin %12 : vector<8x32xf32>
    %14 = math.cos %12 : vector<8x32xf32>
    %15 = arith.select %3, %13, %14 : vector<8x32xi1>, vector<8x32xf32>
    %c0_2 = arith.constant 0 : index
    %c0_3 = arith.constant 0 : index
    %16 = vector.load %arg2[%c0_2, %c0_3] : memref<8x32xf32, #tpu.memory_space<vmem>>, vector<8x32xf32>
    tpu.vector_store %arg2[%c0_2, %c0_3], %15 {strides = array<i32>} : memref<8x32xf32, #tpu.memory_space<vmem>>, vector<8x32xf32>,
    return
  }
  func.func @transform_0(%arg0: i32) -> (i32, i32) {
    %c0_i32 = arith.constant 0 : i32
    %c0_i32_0 = arith.constant 0 : i32
    return %arg0, %c0_i32 : i32, i32
  }
  func.func @transform_1(%arg0: i32) -> (i32, i32) {
    %c0_i32 = arith.constant 0 : i32
    %c0_i32_0 = arith.constant 0 : i32
    return %arg0, %c0_i32 : i32, i32
  }
}

</mosaic_0001>

<llo_original>
// kernel: sinusoidal_position_embeddings.1
$region0: #{sinusoidal_position_embeddings.1}
  #allocation0 [shape = 'u32[]', space=smem, size = 0x4, offset = 0x4, fixed_abs, tag = 'smem constant byte address 0x4 - core index']
  #allocation1 [shape = 'u32[72,128]{1,0:T(1,128)}', space=vmem, size = 0x9000, scoped, tag = 'internal scratch']
  %s0 = inlined_call_operand.vmem [shape: f32[16,1], index: 0, kind: input, shape index: {}]
  %s1 = inlined_call_operand.hbm [shape: f32[16,32], index: 1, kind: output, shape index: {}]
  %s2 = sld [smem:[#allocation0]]
  $region37: #{sinusoidal_position_embeddings.1} parent=0
    _
  %s4 = ssub.s32 1, %s2
  %s5 = scalar_select 0, %s4, %s2
  $region1: #{sinusoidal_position_embeddings.1} parent=0
    #allocation2 [shape = 'u8[8192]{0}', space=vmem, size = 0x2000, scoped, tag = 'output window, operand 0']
    #allocation3 [shape = 's32[2]{0}', space=sflag, size = 0x8, scoped, tag = 'scoped memory for sinusoidal_position_embeddings.1']
    %6 = vsyncpa [#allocation3], 0
    %s7 = scalar_lea.sflag [#allocation3], 1
    %8 = vsyncpa %s7, 0
    loop: start=0, step=1, limit=4
    $region2: #{sinusoidal_position_embeddings.1} parent=1 // loop_pre_header
      _
    $region3: #{sinusoidal_position_embeddings.1} parent=1 // loop_header
      %s10 = sphi 0, %s14
      %p11 = scmp.ge.s32.totalorder %s10, 4
      %s20 = sphi 0, %s22
      %s23 = sphi 0, %s20
      %s24 = sphi 0, %s23
      %s40 = sphi 0, %s24
      %s46 = sphi 0, %s48
      %s49 = sphi 0, %s46
      %s50 = sphi 0, %s49
      %s66 = sphi 0, %s50
    $region4: #{sinusoidal_position_embeddings.1} parent=1 // loop_header_branch
      %13 = sbr.rel (%p11) target = $region8
    $region5: #{sinusoidal_position_embeddings.1} parent=1 // loop_body
      %s15 = ssub.s32 %s10, 1
      %s16 = ssub.s32 %s10, 2
      %s17 = sadd.s32 %s10, 1
      %s18 = ssub.s32 %s10, %s17
      %p19 = scmp.eq.s32.totalorder %s18, 0
      %s21 = sadd.s32 %s20, 1
      %s22 = scalar_select %p19, %s20, %s21
      %p25 = pneg %p19
      %p26 = scmp.eq.s32.totalorder %s10, 1
      %p27 = por %p25, %p26
      %p28 = scmp.ne.s32.totalorder %s20, %s23
      %p29 = scmp.eq.s32.totalorder %s10, 0
      %p30 = por %p28, %p29
      %p31 = scmp.ne.s32.totalorder %s20, %s23
      %p32 = scmp.eq.s32.totalorder %s15, 1
      %p33 = por %p31, %p32
      %p34 = scmp.ne.s32.totalorder %s23, %s24
      %p35 = scmp.eq.s32.totalorder %s15, 0
      %p36 = por %p34, %p35
      %p37 = scmp.ne.s32.totalorder %s23, %s24
      %p38 = scmp.eq.s32.totalorder %s16, 1
      %p39 = por %p37, %p38
      %p41 = scmp.ne.s32.totalorder %s24, %s40
      %p42 = scmp.eq.s32.totalorder %s16, 0
      %p43 = por %p41, %p42
      %s44 = ssub.s32 %s10, %s17
      %p45 = scmp.eq.s32.totalorder %s44, 0
      %s47 = sadd.s32 %s46, 1
      %s48 = scalar_select %p45, %s46, %s47
      %p51 = pneg %p45
      %p52 = scmp.eq.s32.totalorder %s10, 1
      %p53 = por %p51, %p52
      %p54 = scmp.ne.s32.totalorder %s46, %s49
      %p55 = scmp.eq.s32.totalorder %s10, 0
      %p56 = por %p54, %p55
      %p57 = scmp.ne.s32.totalorder %s46, %s49
      %p58 = scmp.eq.s32.totalorder %s15, 1
      %p59 = por %p57, %p58
      %p60 = scmp.ne.s32.totalorder %s49, %s50
      %p61 = scmp.eq.s32.totalorder %s15, 0
      %p62 = por %p60, %p61
      %p63 = scmp.ne.s32.totalorder %s49, %s50
      %p64 = scmp.eq.s32.totalorder %s16, 1
      %p65 = por %p63, %p64
      %p67 = scmp.ne.s32.totalorder %s50, %s66
      %p68 = scmp.eq.s32.totalorder %s16, 0
      %p69 = por %p67, %p68
      %p70 = scmp.le.s32.totalorder 1, %s10
      %p71 = scmp.lt.s32.totalorder %s10, 3
      %p72 = pnand %p70, %p71
      %p73 = pneg %p72
      // Predicated region
      $region9: #{sinusoidal_position_embeddings.1} parent=5 // pred_check
        _
      $region10: #{sinusoidal_position_embeddings.1} parent=5 // pred_check_branch
        %75 = sbr.rel (%p72) target = $region12
      $region11: #{sinusoidal_position_embeddings.1} parent=5 // pred_region
        %s76 = ssub.s32 %s10, 1
      $region12: #{sinusoidal_position_embeddings.1} parent=5 // pred_fallthru
        _
      %p77 = scmp.lt.s32.totalorder %s10, 2
      // Predicated region
      $region13: #{sinusoidal_position_embeddings.1} parent=5 // pred_check
        %p78 = pneg %p77
      $region14: #{sinusoidal_position_embeddings.1} parent=5 // pred_check_branch
        %80 = sbr.rel (%p78) target = $region16
      $region15: #{sinusoidal_position_embeddings.1} parent=5 // pred_region
        // Predicated region
        $region17: #{sinusoidal_position_embeddings.1} parent=15 // pred_check
          %p81 = pneg %p30
        $region18: #{sinusoidal_position_embeddings.1} parent=15 // pred_check_branch
          %83 = sbr.rel (%p81) target = $region20
        $region19: #{sinusoidal_position_embeddings.1} parent=15 // pred_region
          %p84 = scmp.lt.s32.totalorder %s10, 1
          %s85 = scalar_select %p84, %s10, 1
          %s86 = smul.addr %s85, 8
          %s87 = scalar_lea.vmem %s0, %s86
        $region20: #{sinusoidal_position_embeddings.1} parent=15 // pred_fallthru
          _
      $region16: #{sinusoidal_position_embeddings.1} parent=5 // pred_fallthru
        _
      %p88 = scmp.le.s32.totalorder 1, %s10
      %p89 = scmp.lt.s32.totalorder %s10, 3
      %p90 = pnand %p88, %p89
      %p91 = pneg %p90
      // Predicated region
      $region21: #{sinusoidal_position_embeddings.1} parent=5 // pred_check
        _
      $region22: #{sinusoidal_position_embeddings.1} parent=5 // pred_check_branch
        %93 = sbr.rel (%p90) target = $region24
      $region23: #{sinusoidal_position_embeddings.1} parent=5 // pred_region
        %s94 = ssub.s32 %s10, 1
        %p95 = scmp.lt.s32.totalorder %s15, 1
        %s96 = scalar_select %p95, %s15, 1
        %s97 = smul.addr %s96, 8
        %s98 = scalar_lea.vmem %s0, %s97
        %p99 = pneg %p36
        %p100 = pneg %p33
        %p101 = pneg %p62
        %p102 = pneg %p59
        %s103 = sand.u32 %s49, 1
        %s104 = scalar_lea.sflag [#allocation3], %s103
        %s105 = sand.u32 %s49, 1
        %s106 = smul.addr %s105, 8
        %s107 = scalar_lea.vmem [#allocation2], %s106
        %p108 = scmp.lt.s32.totalorder %s15, 1
        %s109 = scalar_select %p108, %s15, 1
        %s110 = smul.addr %s109, 8
        %s111 = scalar_lea.vmem %s0, %s110
        %v112 = vld [vmem:[%s111] sm:$0xff]
        %v113 = vlaneseq
        %v114 = vand.u32 %v113, 127
        %vm115 = vcmp.lt.s32.totalorder %v114, 16
        %v116 = vsub.s32 %v114, 16
        %v117 = vsel %vm115, %v114, %v116
        %v118 = vcvt.s32.f32 %v117
        %v119 = vmul.f32 %v118, -0.6140227
        %v120 = vmul.f32 %v119, 1.442695
        %v121 = vpow.pop %v120
        %123 = vset.pattern.permute.xlu0 0
        %124 = vperm.xlu0 %123, %v112
        %v125 = vpop.permute.xlu0 %124
        %v127 = vmul.f32 %v125, %v121
        %v128 = vand.u32 2147483647, %v127
        %vm129 = vcmp.le.f32.partialorder %v128, 0.7853982
        %vm130 = vcmp.lt.s32.totalorder %v127, 0
        %v131 = vand.u32 %v127, 2139095040
        %v132 = vshrl.u32 %v131, 23
        %v133 = vsub.s32 %v132, 127
        %v134 = vand.u32 2147483647, %v127
        %v135 = vand.u32 %v134, 8388607
        %v136 = vor.u32 %v135, 8388608
        %v137 = vsub.s32 0, %v136
        %v138 = vadd.s32 %v133, 1
        %vm139 = vcmp.gt.s32.totalorder %v138, 0
        %v140 = vsel %vm139, %v138, 0
        %v141 = vshrl.u32 %v140, 5
        %v142 = vand.u32 %v140, 31
        %v143 = vsub.s32 32, %v142
        %v144 = vshrl.u32 683565275, %v143
        %v145 = vshll.u32 683565275, %v142
        %v146 = vshrl.u32 2475754826, %v143
        %v147 = vor.u32 %v145, %v146
        %v148 = vshll.u32 2475754826, %v142
        %v149 = vshrl.u32 2131351028, %v143
        %v150 = vor.u32 %v148, %v149
        %v151 = vshll.u32 2131351028, %v142
        %v152 = vshrl.u32 2102212464, %v143
        %v153 = vor.u32 %v151, %v152
        %v154 = vshll.u32 2102212464, %v142
        %v155 = vshrl.u32 920167782, %v143
        %v156 = vor.u32 %v154, %v155
        %v157 = vshll.u32 920167782, %v142
        %v158 = vshrl.u32 1326507024, %v143
        %v159 = vor.u32 %v157, %v158
        %vm160 = vcmp.lt.s32.totalorder %v141, 1
        %vm161 = vcmp.lt.s32.totalorder %v141, 2
        %vm162 = vcmp.lt.s32.totalorder %v141, 3
        %vm163 = vcmp.lt.s32.totalorder %v141, 4
        %v164 = vsel %vm160, %v144, %v147
        %v165 = vsel %vm163, %v153, 2102212464
        %v166 = vsel %vm162, %v150, %v165
        %v167 = vsel %vm161, %v164, %v166
        %v168 = vsel %vm160, %v147, %v150
        %v169 = vsel %vm163, %v156, 920167782
        %v170 = vsel %vm162, %v153, %v169
        %v171 = vsel %vm161, %v168, %v170
        %v172 = vsel %vm160, %v150, %v153
        %v173 = vsel %vm163, %v159, 1326507024
        %v174 = vsel %vm162, %v156, %v173
        %v175 = vsel %vm161, %v172, %v174
        %v176 = vshll.u32 %v136, 8
        %v177 = vand.u32 %v176, 65535
        %v178 = vshrl.u32 %v176, 16
        %v179 = vand.u32 %v175, 65535
        %v180 = vshrl.u32 %v175, 16
        %v181 = vmul.u32 %v177, %v179
        %v182 = vmul.u32 %v177, %v180
        %v183 = vmul.u32 %v178, %v179
        %v184 = vmul.u32 %v178, %v180
        %v185 = vshll.u32 %v182, 16
        %v186 = vshrl.u32 %v182, 16
        %v187 = vshll.u32 %v183, 16
        %v188 = vshrl.u32 %v183, 16
        %vm189 = vc.u32 %v181, %v185
        %v190 = vsel %vm189, 1, 0
        %v191 = vadd.s32 %v181, %v185
        %v192 = vadd.s32 %v184, %v190
        %vm193 = vc.u32 %v191, %v187
        %v194 = vsel %vm193, 1, 0
        %v195 = vadd.s32 %v191, %v187
        %v196 = vadd.s32 %v192, %v194
        %v197 = vadd.s32 %v196, %v186
        %v198 = vadd.s32 %v197, %v188
        %v199 = vand.u32 %v176, 65535
        %v200 = vshrl.u32 %v176, 16
        %v201 = vand.u32 %v171, 65535
        %v202 = vshrl.u32 %v171, 16
        %v203 = vmul.u32 %v199, %v201
        %v204 = vmul.u32 %v199, %v202
        %v205 = vmul.u32 %v200, %v201
        %v206 = vmul.u32 %v200, %v202
        %v207 = vshll.u32 %v204, 16
        %v208 = vshrl.u32 %v204, 16
        %v209 = vshll.u32 %v205, 16
        %v210 = vshrl.u32 %v205, 16
        %vm211 = vc.u32 %v203, %v207
        %v212 = vsel %vm211, 1, 0
        %v213 = vadd.s32 %v203, %v207
        %v214 = vadd.s32 %v206, %v212
        %vm215 = vc.u32 %v213, %v209
        %v216 = vsel %vm215, 1, 0
        %v217 = vadd.s32 %v213, %v209
        %v218 = vadd.s32 %v214, %v216
        %v219 = vadd.s32 %v218, %v208
        %v220 = vadd.s32 %v219, %v210
        %v221 = vmul.u32 %v176, %v167
        %v222 = vadd.s32 %v198, %v217
        %vm223 = vc.u32 %v198, %v217
        %v224 = vadd.s32 %v220, 1
        %v225 = vsel %vm223, %v224, %v220
        %v226 = vadd.s32 %v221, %v225
        %v227 = vadd.s32 %v226, 536870912
        %v228 = vshrl.u32 %v227, 30
        %v229 = vshll.u32 %v228, 30
        %v230 = vsub.s32 %v226, %v229
        %vm231 = vcmp.lt.s32.totalorder %v230, 0
        %v232 = vsub.s32 0, %v230
        %v233 = vsel %vm231, %v232, %v230
        %v234 = vclz %v233
        %v235 = vsub.s32 %v234, 2
        %vm236 = vcmp.gt.s32.totalorder 0, %v235
        %v237 = vsel %vm236, 0, %v235
        %v238 = vsub.s32 32, %v237
        %v239 = vshll.u32 %v230, %v237
        %v240 = vshrl.u32 %v222, %v238
        %v241 = vor.u32 %v239, %v240
        %v242 = vsub.s32 4294967266, %v237
        %v243 = vadd.s32 %v242, 127
        %v244 = vshll.u32 %v243, 23
        %v245 = vor.u32 4788187, %v244
        %v246 = vand.u32 2147483647, %v245
        %v248 = vcvt.s32.f32 %v241
        %v249 = vmul.f32 %v248, %v246
        %v250 = vxor.u32 %v249, 2147483648
        %v251 = vsel %vm130, %v250, %v249
        %v252 = vsub.s32 4, %v228
        %v253 = vsel %vm130, %v252, %v228
        %v254 = vsel %vm129, %v127, %v251
        %v255 = vsel %vm129, 0, %v253
        %v256 = vmul.f32 %v254, %v254
        %v257 = vmul.f32 %v256, -0.001358992
        %v258 = vadd.f32 %v257, 0.041655596
        %v259 = vmul.f32 %v256, %v258
        %v260 = vadd.f32 %v259, -0.4999988
        %v261 = vmul.f32 %v256, %v260
        %v262 = vadd.f32 1.0, %v261
        %v263 = vmul.f32 %v254, %v254
        %v264 = vmul.f32 %v263, -0.00019511016
        %v265 = vadd.f32 %v264, 0.008332121
        %v266 = vmul.f32 %v263, %v265
        %v267 = vadd.f32 %v266, -0.16666654
        %v268 = vmul.f32 %v263, %v267
        %v269 = vadd.f32 %v268, 1.0
        %v270 = vmul.f32 %v269, %v254
        %vm271 = vweird.f32 %v127
        %v272 = vadd.s32 %v255, 3
        %v273 = vand.u32 %v272, 3
        %vm274 = vcmp.lt.s32.totalorder %v273, 2
        %vm275 = vcmp.eq.s32.totalorder %v273, 0
        %v276 = vxor.u32 %v270, 2147483648
        %v277 = vsel %vm275, %v262, %v276
        %vm278 = vcmp.eq.s32.totalorder %v273, 2
        %v279 = vxor.u32 %v262, 2147483648
        %v280 = vsel %vm278, %v279, %v270
        %v281 = vsel %vm274, %v277, %v280
        %v282 = vsel %vm271, nan, %v281
        %v283 = vand.u32 2147483647, %v127
        %vm284 = vcmp.le.f32.partialorder %v283, 0.7853982
        %vm285 = vcmp.lt.s32.totalorder %v127, 0
        %v286 = vand.u32 %v127, 2139095040
        %v287 = vshrl.u32 %v286, 23
        %v288 = vsub.s32 %v287, 127
        %v289 = vand.u32 2147483647, %v127
        %v290 = vand.u32 %v289, 8388607
        %v291 = vor.u32 %v290, 8388608
        %v292 = vsub.s32 0, %v291
        %v293 = vadd.s32 %v288, 1
        %vm294 = vcmp.gt.s32.totalorder %v293, 0
        %v295 = vsel %vm294, %v293, 0
        %v296 = vshrl.u32 %v295, 5
        %v297 = vand.u32 %v295, 31
        %v298 = vsub.s32 32, %v297
        %v299 = vshrl.u32 683565275, %v298
        %v300 = vshll.u32 683565275, %v297
        %v301 = vshrl.u32 2475754826, %v298
        %v302 = vor.u32 %v300, %v301
        %v303 = vshll.u32 2475754826, %v297
        %v304 = vshrl.u32 2131351028, %v298
        %v305 = vor.u32 %v303, %v304
        %v306 = vshll.u32 2131351028, %v297
        %v307 = vshrl.u32 2102212464, %v298
        %v308 = vor.u32 %v306, %v307
        %v309 = vshll.u32 2102212464, %v297
        %v310 = vshrl.u32 920167782, %v298
        %v311 = vor.u32 %v309, %v310
        %v312 = vshll.u32 920167782, %v297
        %v313 = vshrl.u32 1326507024, %v298
        %v314 = vor.u32 %v312, %v313
        %vm315 = vcmp.lt.s32.totalorder %v296, 1
        %vm316 = vcmp.lt.s32.totalorder %v296, 2
        %vm317 = vcmp.lt.s32.totalorder %v296, 3
        %vm318 = vcmp.lt.s32.totalorder %v296, 4
        %v319 = vsel %vm315, %v299, %v302
        %v320 = vsel %vm318, %v308, 2102212464
        %v321 = vsel %vm317, %v305, %v320
        %v322 = vsel %vm316, %v319, %v321
        %v323 = vsel %vm315, %v302, %v305
        %v324 = vsel %vm318, %v311, 920167782
        %v325 = vsel %vm317, %v308, %v324
        %v326 = vsel %vm316, %v323, %v325
        %v327 = vsel %vm315, %v305, %v308
        %v328 = vsel %vm318, %v314, 1326507024
        %v329 = vsel %vm317, %v311, %v328
        %v330 = vsel %vm316, %v327, %v329
        %v331 = vshll.u32 %v291, 8
        %v332 = vand.u32 %v331, 65535
        %v333 = vshrl.u32 %v331, 16
        %v334 = vand.u32 %v330, 65535
        %v335 = vshrl.u32 %v330, 16
        %v336 = vmul.u32 %v332, %v334
        %v337 = vmul.u32 %v332, %v335
        %v338 = vmul.u32 %v333, %v334
        %v339 = vmul.u32 %v333, %v335
        %v340 = vshll.u32 %v337, 16
        %v341 = vshrl.u32 %v337, 16
        %v342 = vshll.u32 %v338, 16
        %v343 = vshrl.u32 %v338, 16
        %vm344 = vc.u32 %v336, %v340
        %v345 = vsel %vm344, 1, 0
        %v346 = vadd.s32 %v336, %v340
        %v347 = vadd.s32 %v339, %v345
        %vm348 = vc.u32 %v346, %v342
        %v349 = vsel %vm348, 1, 0
        %v350 = vadd.s32 %v346, %v342
        %v351 = vadd.s32 %v347, %v349
        %v352 = vadd.s32 %v351, %v341
        %v353 = vadd.s32 %v352, %v343
        %v354 = vand.u32 %v331, 65535
        %v355 = vshrl.u32 %v331, 16
        %v356 = vand.u32 %v326, 65535
        %v357 = vshrl.u32 %v326, 16
        %v358 = vmul.u32 %v354, %v356
        %v359 = vmul.u32 %v354, %v357
        %v360 = vmul.u32 %v355, %v356
        %v361 = vmul.u32 %v355, %v357
        %v362 = vshll.u32 %v359, 16
        %v363 = vshrl.u32 %v359, 16
        %v364 = vshll.u32 %v360, 16
        %v365 = vshrl.u32 %v360, 16
        %vm366 = vc.u32 %v358, %v362
        %v367 = vsel %vm366, 1, 0
        %v368 = vadd.s32 %v358, %v362
        %v369 = vadd.s32 %v361, %v367
        %vm370 = vc.u32 %v368, %v364
        %v371 = vsel %vm370, 1, 0
        %v372 = vadd.s32 %v368, %v364
        %v373 = vadd.s32 %v369, %v371
        %v374 = vadd.s32 %v373, %v363
        %v375 = vadd.s32 %v374, %v365
        %v376 = vmul.u32 %v331, %v322
        %v377 = vadd.s32 %v353, %v372
        %vm378 = vc.u32 %v353, %v372
        %v379 = vadd.s32 %v375, 1
        %v380 = vsel %vm378, %v379, %v375
        %v381 = vadd.s32 %v376, %v380
        %v382 = vadd.s32 %v381, 536870912
        %v383 = vshrl.u32 %v382, 30
        %v384 = vshll.u32 %v383, 30
        %v385 = vsub.s32 %v381, %v384
        %vm386 = vcmp.lt.s32.totalorder %v385, 0
        %v387 = vsub.s32 0, %v385
        %v388 = vsel %vm386, %v387, %v385
        %v389 = vclz %v388
        %v390 = vsub.s32 %v389, 2
        %vm391 = vcmp.gt.s32.totalorder 0, %v390
        %v392 = vsel %vm391, 0, %v390
        %v393 = vsub.s32 32, %v392
        %v394 = vshll.u32 %v385, %v392
        %v395 = vshrl.u32 %v377, %v393
        %v396 = vor.u32 %v394, %v395
        %v397 = vsub.s32 4294967266, %v392
        %v398 = vadd.s32 %v397, 127
        %v399 = vshll.u32 %v398, 23
        %v400 = vor.u32 4788187, %v399
        %v401 = vand.u32 2147483647, %v400
        %v403 = vcvt.s32.f32 %v396
        %v404 = vmul.f32 %v403, %v401
        %v405 = vxor.u32 %v404, 2147483648
        %v406 = vsel %vm285, %v405, %v404
        %v407 = vsub.s32 4, %v383
        %v408 = vsel %vm285, %v407, %v383
        %v409 = vsel %vm284, %v127, %v406
        %v410 = vsel %vm284, 0, %v408
        %v411 = vmul.f32 %v409, %v409
        %v412 = vmul.f32 %v411, -0.001358992
        %v413 = vadd.f32 %v412, 0.041655596
        %v414 = vmul.f32 %v411, %v413
        %v415 = vadd.f32 %v414, -0.4999988
        %v416 = vmul.f32 %v411, %v415
        %v417 = vadd.f32 1.0, %v416
        %v418 = vmul.f32 %v409, %v409
        %v419 = vmul.f32 %v418, -0.00019511016
        %v420 = vadd.f32 %v419, 0.008332121
        %v421 = vmul.f32 %v418, %v420
        %v422 = vadd.f32 %v421, -0.16666654
        %v423 = vmul.f32 %v418, %v422
        %v424 = vadd.f32 %v423, 1.0
        %v425 = vmul.f32 %v424, %v409
        %vm426 = vweird.f32 %v127
        %v427 = vand.u32 %v410, 3
        %vm428 = vcmp.lt.s32.totalorder %v427, 2
        %vm429 = vcmp.eq.s32.totalorder %v427, 0
        %v430 = vxor.u32 %v425, 2147483648
        %v431 = vsel %vm429, %v417, %v430
        %vm432 = vcmp.eq.s32.totalorder %v427, 2
        %v433 = vxor.u32 %v417, 2147483648
        %v434 = vsel %vm432, %v433, %v425
        %v435 = vsel %vm428, %v431, %v434
        %v436 = vsel %vm426, nan, %v435
        %v437 = vsel %vm115, %v282, %v436
        %vm438 = vcmask 261120
        %439 = vst.msk [vmem:[%s107] sm:$0xff] %vm438, %v437
        %s440 = sand.u32 %s49, 1
        %s441 = scalar_lea.sflag [#allocation3], %s440
        %s442 = sand.u32 %s49, 1
        %s443 = smul.addr %s442, 8
        %s444 = scalar_lea.vmem [#allocation2], %s443
        // Predicated region
        $region25: #{sinusoidal_position_embeddings.1} parent=23 // pred_check
          %p445 = pneg %p59
        $region26: #{sinusoidal_position_embeddings.1} parent=23 // pred_check_branch
          %447 = sbr.rel (%p445) target = $region28
        $region27: #{sinusoidal_position_embeddings.1} parent=23 // pred_region
          %449 = vsyncadd %s441, 0
          %s450 = smul.addr %s15, 8
          %s451 = scalar_lea.hbm %s1, %s450
          %s453 = sshll.u32 %s444, 4
          %s454 = int_to_ptr.vmem [resolvable:$true] %s453
          %s455 = sshll.u32 %s451, 4
          %s456 = int_to_ptr.hbm [resolvable:$true] %s455
          %458 = dma.vmem_to_hbm [thread:$0]  %s454, 128, %s456, %s441
        $region28: #{sinusoidal_position_embeddings.1} parent=23 // pred_fallthru
          _
      $region24: #{sinusoidal_position_embeddings.1} parent=5 // pred_fallthru
        _
      %p459 = scmp.le.s32.totalorder 2, %s10
      // Predicated region
      $region29: #{sinusoidal_position_embeddings.1} parent=5 // pred_check
        %p460 = pneg %p459
      $region30: #{sinusoidal_position_embeddings.1} parent=5 // pred_check_branch
        %462 = sbr.rel (%p460) target = $region32
      $region31: #{sinusoidal_position_embeddings.1} parent=5 // pred_region
        %s463 = ssub.s32 %s10, 2
        // Predicated region
        $region33: #{sinusoidal_position_embeddings.1} parent=31 // pred_check
          %p464 = pneg %p65
        $region34: #{sinusoidal_position_embeddings.1} parent=31 // pred_check_branch
          %466 = sbr.rel (%p464) target = $region36
        $region35: #{sinusoidal_position_embeddings.1} parent=31 // pred_region
          %s467 = sand.u32 %s50, 1
          %s468 = scalar_lea.sflag [#allocation3], %s467
          %s469 = sand.u32 %s50, 1
          %s470 = smul.addr %s469, 8
          %s471 = scalar_lea.vmem [#allocation2], %s470
          %473 = dma.done %s468, 128
        $region36: #{sinusoidal_position_embeddings.1} parent=31 // pred_fallthru
          _
      $region32: #{sinusoidal_position_embeddings.1} parent=5 // pred_fallthru
        _
    $region6: #{sinusoidal_position_embeddings.1} parent=1 // loop_footer
      %s14 = sadd.s32 1, %s10
    $region7: #{sinusoidal_position_embeddings.1} parent=1 // loop_footer_branch
      %9 = sbr.rel target = $region3
    $region8: #{sinusoidal_position_embeddings.1} parent=1 // loop_exit
      _
    %474 = vsyncpa [#allocation3], 1
    %s475 = scalar_lea.sflag [#allocation3], 1
    %476 = vsyncpa %s475, 1

</llo_original>
